<compile_context>
chip_gen: v6e
topology: v6e:2x2x1
jax: 0.10.0
libtpu: 0.0.40
codegen_flags: <defaults>
</compile_context>

<pallas_src>
import numpy as np
import jax
import jax.numpy as jnp
from jax import lax
from jax.experimental import pallas as pl
from jax.experimental.pallas import tpu as pltpu


def _round_up(x, m):
    return ((x + m - 1) // m) * m


def _make_kernel(nf, H, W):
    L = H * W                        # flat spatial length (lane dim)
    HALO = _round_up(W + 1, 128)     # zero halo above/below the image (lane-aligned)
    PW = L + 2 * HALO                # haloed flat width
    C1 = 2 * nf                      # conv1 input channels
    K1 = 9 * C1                      # conv1 stacked contraction dim
    K2 = 9 * nf                      # conv2 stacked contraction dim

    def kernel(nbr_ref, ref_ref, w1_ref, b1_ref, w2_ref, b2_ref, o_ref,
               xpad, a1, ypad, a2):
        # Horizontal-boundary masks for the dx = +-1 taps (built in-kernel, no DMA).
        col = lax.broadcasted_iota(jnp.int32, (1, L), 1) % W
        mask_m1 = col > 0            # dx = -1 valid when x >= 1
        mask_p1 = col < (W - 1)      # dx = +1 valid when x <= W-2

        # ---- haloed, channel-stacked input [nbr ; ref] (f32 staging) ----------
        xpad[:, 0:HALO] = jnp.zeros((C1, HALO), jnp.float32)
        xpad[:, HALO + L:PW] = jnp.zeros((C1, HALO), jnp.float32)
        xpad[0:nf, HALO:HALO + L] = nbr_ref[...].astype(jnp.float32)
        xpad[nf:C1, HALO:HALO + L] = ref_ref[...].astype(jnp.float32)

        # ---- stack the 9 shifted/masked taps along the contraction axis -------
        for ky in range(3):
            for kx in range(3):
                t = ky * 3 + kx
                start = HALO + (ky - 1) * W + (kx - 1)
                tap = xpad[:, start:start + L]
                if kx == 0:
                    tap = jnp.where(mask_m1, tap, 0.0)
                elif kx == 2:
                    tap = jnp.where(mask_p1, tap, 0.0)
                a1[t * C1:(t + 1) * C1, :] = tap

        # ---- conv1: single MXU matmul (K = 9*2nf) + folded BN1 + ReLU ---------
        acc1 = jnp.dot(w1_ref[...], a1[...].astype(jnp.bfloat16),
                       preferred_element_type=jnp.float32)
        y1 = jnp.maximum(acc1 + b1_ref[...], 0.0)

        # ---- re-halo conv1 output (never leaves VMEM) --------------------------
        ypad[:, 0:HALO] = jnp.zeros((nf, HALO), jnp.float32)
        ypad[:, HALO + L:PW] = jnp.zeros((nf, HALO), jnp.float32)
        ypad[:, HALO:HALO + L] = y1

        for ky in range(3):
            for kx in range(3):
                t = ky * 3 + kx
                start = HALO + (ky - 1) * W + (kx - 1)
                tap = ypad[:, start:start + L]
                if kx == 0:
                    tap = jnp.where(mask_m1, tap, 0.0)
                elif kx == 2:
                    tap = jnp.where(mask_p1, tap, 0.0)
                a2[t * nf:(t + 1) * nf, :] = tap

        # ---- conv2: single MXU matmul (K = 9*nf) + folded BN2 + ReLU -----------
        acc2 = jnp.dot(w2_ref[...], a2[...].astype(jnp.bfloat16),
                       preferred_element_type=jnp.float32)
        # single lane-dense store of the whole (nf, L) output slab
        o_ref[...] = jnp.maximum(acc2 + b2_ref[...], 0.0)

    return kernel, L, PW, K1, K2


def basic_fusion_forward(nbr, ref_feat,
                         w1, gamma1, beta1, mean1, var1,
                         w2, gamma2, beta2, mean2, var2,
                         eps=1e-5):
    N, nf, H, W = nbr.shape
    kernel, L, PW, K1, K2 = _make_kernel(nf, H, W)

    # ---- fold BN (eval mode / running stats) into conv weights + bias ----------
    s1 = gamma1 / jnp.sqrt(var1 + eps)
    s2 = gamma2 / jnp.sqrt(var2 + eps)
    w1f = (w1 * s1[:, None, None, None]).astype(jnp.float32)       # (nf, 2nf, 3, 3)
    w2f = (w2 * s2[:, None, None, None]).astype(jnp.float32)       # (nf, nf, 3, 3)
    b1f = (beta1 - s1 * mean1).reshape(nf, 1).astype(jnp.float32)
    b2f = (beta2 - s2 * mean2).reshape(nf, 1).astype(jnp.float32)

    # stacked-tap weights: [o, (ky*3+kx)*Cin + c]  (bf16 MXU operands)
    w1s = jnp.transpose(w1f, (2, 3, 1, 0)).reshape(K1, nf).T.astype(jnp.bfloat16)
    w2s = jnp.transpose(w2f, (2, 3, 1, 0)).reshape(K2, nf).T.astype(jnp.bfloat16)

    # lane-dense flat activations: reshape is free (contiguous); bf16 halves HBM bytes
    nbr_f = nbr.reshape(N, nf, L).astype(jnp.bfloat16)
    ref_f = ref_feat.reshape(N, nf, L).astype(jnp.bfloat16)

    flops = 2 * N * L * nf * (K1 + K2)
    bytes_accessed = (2 * N * nf * L * 2          # bf16 inputs
                      + N * nf * L * 4            # f32 output
                      + nf * (K1 + K2) * 2        # bf16 weights
                      + 2 * nf * 4)               # biases

    out = pl.pallas_call(
        kernel,
        out_shape=jax.ShapeDtypeStruct((N, nf, L), jnp.float32),
        grid_spec=pltpu.PrefetchScalarGridSpec(
            num_scalar_prefetch=0,
            grid=(N,),
            in_specs=[
                pl.BlockSpec((None, nf, L), lambda n: (n, 0, 0)),    # nbr (per image)
                pl.BlockSpec((None, nf, L), lambda n: (n, 0, 0)),    # ref (per image)
                pl.BlockSpec((nf, K1), lambda n: (0, 0)),            # conv1 stacked w
                pl.BlockSpec((nf, 1), lambda n: (0, 0)),             # bias1 (folded BN)
                pl.BlockSpec((nf, K2), lambda n: (0, 0)),            # conv2 stacked w
                pl.BlockSpec((nf, 1), lambda n: (0, 0)),             # bias2 (folded BN)
            ],
            out_specs=pl.BlockSpec((None, nf, L), lambda n: (n, 0, 0)),
            scratch_shapes=[
                pltpu.VMEM((2 * nf, PW), jnp.float32),   # haloed concat input
                pltpu.VMEM((K1, L), jnp.float32),        # conv1 stacked taps
                pltpu.VMEM((nf, PW), jnp.float32),       # haloed conv1 output
                pltpu.VMEM((K2, L), jnp.float32),        # conv2 stacked taps
            ],
        ),
        compiler_params=pltpu.CompilerParams(
            dimension_semantics=("parallel",),
            vmem_limit_bytes=32 * 1024 * 1024),
        cost_estimate=pl.CostEstimate(flops=flops, transcendentals=0,
                                      bytes_accessed=bytes_accessed),
    )(nbr_f, ref_f, w1s, b1f, w2s, b2f)

    # de-flatten in the wrapper (free, contiguous reshape)
    return out.reshape(N, nf, H, W)


# ---------------------------- numpy reference --------------------------------
def _np_conv3x3(x, w):
    N, C, H, W = x.shape
    O = w.shape[0]
    xp = np.pad(x, ((0, 0), (0, 0), (1, 1), (1, 1)))
    out = np.zeros((N, O, H, W), np.float32)
    for ky in range(3):
        for kx in range(3):
            out += np.einsum('oc,nchw->nohw', w[:, :, ky, kx],
                             xp[:, :, ky:ky + H, kx:kx + W])
    return out


def _np_bn_relu(x, gamma, beta, mean, var, eps=1e-5):
    y = (x - mean[None, :, None, None]) / np.sqrt(var[None, :, None, None] + eps)
    y = y * gamma[None, :, None, None] + beta[None, :, None, None]
    return np.maximum(y, 0.0)


def reference(nbr, ref_feat, w1, g1, b1, m1, v1, w2, g2, b2, m2, v2):
    f32 = lambda a: np.asarray(a, np.float32)
    x = np.concatenate([f32(nbr), f32(ref_feat)], axis=1)
    x = _np_bn_relu(_np_conv3x3(x, f32(w1)), f32(g1), f32(b1), f32(m1), f32(v1))
    x = _np_bn_relu(_np_conv3x3(x, f32(w2)), f32(g2), f32(b2), f32(m2), f32(v2))
    return x


if __name__ == "__main__":
    key = jax.random.PRNGKey(0)
    ks = jax.random.split(key, 12)

    N, nf, H, W = 2, 4, 16, 16
    nbr = jax.random.normal(ks[0], (N, nf, H, W), jnp.float32)
    ref_feat = jax.random.normal(ks[1], (N, nf, H, W), jnp.float32)

    # conv1: Conv2d(2*nf, nf, 3, padding=1, bias=False) + BatchNorm2d(nf)
    w1 = jax.random.normal(ks[2], (nf, 2 * nf, 3, 3), jnp.float32) * 0.1
    gamma1 = 1.0 + 0.1 * jax.random.normal(ks[3], (nf,), jnp.float32)
    beta1 = 0.1 * jax.random.normal(ks[4], (nf,), jnp.float32)
    mean1 = 0.1 * jax.random.normal(ks[5], (nf,), jnp.float32)
    var1 = 1.0 + 0.1 * jnp.abs(jax.random.normal(ks[6], (nf,), jnp.float32))

    # conv2: Conv2d(nf, nf, 3, padding=1, bias=False) + BatchNorm2d(nf)
    w2 = jax.random.normal(ks[7], (nf, nf, 3, 3), jnp.float32) * 0.1
    gamma2 = 1.0 + 0.1 * jax.random.normal(ks[8], (nf,), jnp.float32)
    beta2 = 0.1 * jax.random.normal(ks[9], (nf,), jnp.float32)
    mean2 = 0.1 * jax.random.normal(ks[10], (nf,), jnp.float32)
    var2 = 1.0 + 0.1 * jnp.abs(jax.random.normal(ks[11], (nf,), jnp.float32))

    y = jax.block_until_ready(
        basic_fusion_forward(nbr, ref_feat,
                             w1, gamma1, beta1, mean1, var1,
                             w2, gamma2, beta2, mean2, var2))
    assert y.shape == (N, nf, H, W)

    y_ref = reference(nbr, ref_feat, w1, gamma1, beta1, mean1, var1,
                      w2, gamma2, beta2, mean2, var2)
    # bf16 MXU operands -> looser tolerance than the pure-f32 version
    np.testing.assert_allclose(np.asarray(y), y_ref, rtol=3e-2, atol=3e-2)
    print("KERNEL_OK")
</pallas_src>

<mosaic_0001>
module attributes {stable_mosaic.version = 11 : i64} {
  func.func @kernel(%arg0: i32, %arg1: memref<1x4x256xbf16, #tpu.memory_space<vmem>>, %arg2: memref<1x4x256xbf16, #tpu.memory_space<vmem>>, %arg3: memref<4x72xbf16, #tpu.memory_space<vmem>>, %arg4: memref<4x1xf32, #tpu.memory_space<vmem>>, %arg5: memref<4x36xbf16, #tpu.memory_space<vmem>>, %arg6: memref<4x1xf32, #tpu.memory_space<vmem>>, %arg7: memref<1x4x256xf32, #tpu.memory_space<vmem>>, %arg8: memref<8x512xf32, #tpu.memory_space<vmem>>, %arg9: memref<72x256xf32, #tpu.memory_space<vmem>>, %arg10: memref<4x512xf32, #tpu.memory_space<vmem>>, %arg11: memref<36x256xf32, #tpu.memory_space<vmem>>) attributes {dimension_semantics = [#tpu.dimension_semantics<parallel>], iteration_bounds = array<i64: 2>, scalar_prefetch = 0 : i64, scratch_operands = 4 : i64, tpu.core_type = #tpu.core_type<tc>, window_params = [{transform_indices = @transform_0, window_bounds = array<i64: 1, 4, 256>}, {transform_indices = @transform_1, window_bounds = array<i64: 1, 4, 256>}, {pipeline_mode = #tpu.pipeline_mode<synchronous>, transform_indices = @transform_2, window_bounds = array<i64: 4, 72>}, {pipeline_mode = #tpu.pipeline_mode<synchronous>, transform_indices = @transform_3, window_bounds = array<i64: 4, 1>}, {pipeline_mode = #tpu.pipeline_mode<synchronous>, transform_indices = @transform_4, window_bounds = array<i64: 4, 36>}, {pipeline_mode = #tpu.pipeline_mode<synchronous>, transform_indices = @transform_5, window_bounds = array<i64: 4, 1>}, {transform_indices = @transform_6, window_bounds = array<i64: 1, 4, 256>}]} {
    %0 = tpu.iota {dimensions = array<i32: 1>} : vector<1x256xi32>
    %c16_i32 = arith.constant 16 : i32
    %c0_i32 = arith.constant 0 : i32
    %1 = arith.cmpi eq, %c16_i32, %c0_i32 : i32
    %c1_i32 = arith.constant 1 : i32
    %2 = arith.select %1, %c1_i32, %c16_i32 : i32
    %3 = vector.broadcast %2 : i32 to vector<1x256xi32>
    %4 = arith.remsi %0, %3 : vector<1x256xi32>
    %c0_i32_0 = arith.constant 0 : i32
    %5 = vector.broadcast %c0_i32_0 : i32 to vector<1x256xi32>
    %6 = arith.cmpi ne, %4, %5 : vector<1x256xi32>
    %c0_i32_1 = arith.constant 0 : i32
    %7 = vector.broadcast %c0_i32_1 : i32 to vector<1x256xi32>
    %8 = arith.cmpi slt, %4, %7 : vector<1x256xi32>
    %c0_i32_2 = arith.constant 0 : i32
    %9 = arith.cmpi slt, %2, %c0_i32_2 : i32
    %10 = vector.broadcast %9 : i1 to vector<1x256xi1>
    %11 = vector.broadcast %10 : vector<1x256xi1> to vector<1x256xi1>
    %12 = arith.xori %8, %11 : vector<1x256xi1>
    %13 = arith.andi %12, %6 : vector<1x256xi1>
    %14 = vector.broadcast %2 : i32 to vector<1x256xi32>
    %15 = arith.addi %4, %14 : vector<1x256xi32>
    %16 = arith.select %13, %15, %4 : vector<1x256xi1>, vector<1x256xi32>
    %c0_i32_3 = arith.constant 0 : i32
    %17 = vector.broadcast %c0_i32_3 : i32 to vector<1x256xi32>
    %18 = arith.cmpi sgt, %16, %17 : vector<1x256xi32>
    %c15_i32 = arith.constant 15 : i32
    %19 = vector.broadcast %c15_i32 : i32 to vector<1x256xi32>
    %20 = arith.cmpi slt, %16, %19 : vector<1x256xi32>
    %cst = arith.constant 0.000000e+00 : f32
    %21 = vector.broadcast %cst : f32 to vector<8x128xf32>
    %c0 = arith.constant 0 : index
    %c0_4 = arith.constant 0 : index
    %22 = vector.load %arg8[%c0, %c0_4] : memref<8x512xf32, #tpu.memory_space<vmem>>, vector<8x128xf32>
    tpu.vector_store %arg8[%c0, %c0_4], %21 {strides = array<i32>} : memref<8x512xf32, #tpu.memory_space<vmem>>, vector<8x128xf32>,
    %cst_5 = arith.constant 0.000000e+00 : f32
    %23 = vector.broadcast %cst_5 : f32 to vector<8x128xf32>
    %c0_6 = arith.constant 0 : index
    %c384 = arith.constant 384 : index
    %24 = vector.load %arg8[%c0_6, %c384] : memref<8x512xf32, #tpu.memory_space<vmem>>, vector<8x128xf32>
    tpu.vector_store %arg8[%c0_6, %c384], %23 {strides = array<i32>} : memref<8x512xf32, #tpu.memory_space<vmem>>, vector<8x128xf32>,
    %c0_7 = arith.constant 0 : index
    %c0_8 = arith.constant 0 : index
    %c0_9 = arith.constant 0 : index
    %25 = vector.load %arg1[%c0_7, %c0_8, %c0_9] : memref<1x4x256xbf16, #tpu.memory_space<vmem>>, vector<1x4x256xbf16>
    %26 = vector.shape_cast %25 : vector<1x4x256xbf16> to vector<4x256xbf16>
    %27 = arith.extf %26 : vector<4x256xbf16> to vector<4x256xf32>
    %c0_10 = arith.constant 0 : index
    %c128 = arith.constant 128 : index
    %28 = vector.load %arg8[%c0_10, %c128] : memref<8x512xf32, #tpu.memory_space<vmem>>, vector<4x256xf32>
    tpu.vector_store %arg8[%c0_10, %c128], %27 {strides = array<i32>} : memref<8x512xf32, #tpu.memory_space<vmem>>, vector<4x256xf32>,
    %c0_11 = arith.constant 0 : index
    %c0_12 = arith.constant 0 : index
    %c0_13 = arith.constant 0 : index
    %29 = vector.load %arg2[%c0_11, %c0_12, %c0_13] : memref<1x4x256xbf16, #tpu.memory_space<vmem>>, vector<1x4x256xbf16>
    %30 = vector.shape_cast %29 : vector<1x4x256xbf16> to vector<4x256xbf16>
    %31 = arith.extf %30 : vector<4x256xbf16> to vector<4x256xf32>
    %c4 = arith.constant 4 : index
    %c128_14 = arith.constant 128 : index
    %32 = vector.load %arg8[%c4, %c128_14] : memref<8x512xf32, #tpu.memory_space<vmem>>, vector<4x256xf32>
    tpu.vector_store %arg8[%c4, %c128_14], %31 {strides = array<i32>} : memref<8x512xf32, #tpu.memory_space<vmem>>, vector<4x256xf32>,
    %c0_15 = arith.constant 0 : index
    %c111 = arith.constant 111 : index
    %33 = vector.load %arg8[%c0_15, %c111] : memref<8x512xf32, #tpu.memory_space<vmem>>, vector<8x256xf32>
    %cst_16 = arith.constant 0.000000e+00 : f32
    %34 = vector.shape_cast %18 : vector<1x256xi1> to vector<1x256xi1>
    %35 = vector.broadcast %34 : vector<1x256xi1> to vector<8x256xi1>
    %36 = vector.broadcast %cst_16 : f32 to vector<8x256xf32>
    %37 = arith.select %35, %33, %36 : vector<8x256xi1>, vector<8x256xf32>
    %c0_17 = arith.constant 0 : index
    %c0_18 = arith.constant 0 : index
    %38 = vector.load %arg9[%c0_17, %c0_18] : memref<72x256xf32, #tpu.memory_space<vmem>>, vector<8x256xf32>
    tpu.vector_store %arg9[%c0_17, %c0_18], %37 {strides = array<i32>} : memref<72x256xf32, #tpu.memory_space<vmem>>, vector<8x256xf32>,
    %c0_19 = arith.constant 0 : index
    %c112 = arith.constant 112 : index
    %39 = vector.load %arg8[%c0_19, %c112] : memref<8x512xf32, #tpu.memory_space<vmem>>, vector<8x256xf32>
    %c8 = arith.constant 8 : index
    %c0_20 = arith.constant 0 : index
    %40 = vector.load %arg9[%c8, %c0_20] : memref<72x256xf32, #tpu.memory_space<vmem>>, vector<8x256xf32>
    tpu.vector_store %arg9[%c8, %c0_20], %39 {strides = array<i32>} : memref<72x256xf32, #tpu.memory_space<vmem>>, vector<8x256xf32>,
    %c0_21 = arith.constant 0 : index
    %c113 = arith.constant 113 : index
    %41 = vector.load %arg8[%c0_21, %c113] : memref<8x512xf32, #tpu.memory_space<vmem>>, vector<8x256xf32>
    %cst_22 = arith.constant 0.000000e+00 : f32
    %42 = vector.shape_cast %20 : vector<1x256xi1> to vector<1x256xi1>
    %43 = vector.broadcast %42 : vector<1x256xi1> to vector<8x256xi1>
    %44 = vector.broadcast %cst_22 : f32 to vector<8x256xf32>
    %45 = arith.select %43, %41, %44 : vector<8x256xi1>, vector<8x256xf32>
    %c16 = arith.constant 16 : index
    %c0_23 = arith.constant 0 : index
    %46 = vector.load %arg9[%c16, %c0_23] : memref<72x256xf32, #tpu.memory_space<vmem>>, vector<8x256xf32>
    tpu.vector_store %arg9[%c16, %c0_23], %45 {strides = array<i32>} : memref<72x256xf32, #tpu.memory_space<vmem>>, vector<8x256xf32>,
    %c0_24 = arith.constant 0 : index
    %c127 = arith.constant 127 : index
    %47 = vector.load %arg8[%c0_24, %c127] : memref<8x512xf32, #tpu.memory_space<vmem>>, vector<8x256xf32>
    %cst_25 = arith.constant 0.000000e+00 : f32
    %48 = vector.shape_cast %18 : vector<1x256xi1> to vector<1x256xi1>
    %49 = vector.broadcast %48 : vector<1x256xi1> to vector<8x256xi1>
    %50 = vector.broadcast %cst_25 : f32 to vector<8x256xf32>
    %51 = arith.select %49, %47, %50 : vector<8x256xi1>, vector<8x256xf32>
    %c24 = arith.constant 24 : index
    %c0_26 = arith.constant 0 : index
    %52 = vector.load %arg9[%c24, %c0_26] : memref<72x256xf32, #tpu.memory_space<vmem>>, vector<8x256xf32>
    tpu.vector_store %arg9[%c24, %c0_26], %51 {strides = array<i32>} : memref<72x256xf32, #tpu.memory_space<vmem>>, vector<8x256xf32>,
    %c0_27 = arith.constant 0 : index
    %c128_28 = arith.constant 128 : index
    %53 = vector.load %arg8[%c0_27, %c128_28] : memref<8x512xf32, #tpu.memory_space<vmem>>, vector<8x256xf32>
    %c32 = arith.constant 32 : index
    %c0_29 = arith.constant 0 : index
    %54 = vector.load %arg9[%c32, %c0_29] : memref<72x256xf32, #tpu.memory_space<vmem>>, vector<8x256xf32>
    tpu.vector_store %arg9[%c32, %c0_29], %53 {strides = array<i32>} : memref<72x256xf32, #tpu.memory_space<vmem>>, vector<8x256xf32>,
    %c0_30 = arith.constant 0 : index
    %c129 = arith.constant 129 : index
    %55 = vector.load %arg8[%c0_30, %c129] : memref<8x512xf32, #tpu.memory_space<vmem>>, vector<8x256xf32>
    %cst_31 = arith.constant 0.000000e+00 : f32
    %56 = vector.shape_cast %20 : vector<1x256xi1> to vector<1x256xi1>
    %57 = vector.broadcast %56 : vector<1x256xi1> to vector<8x256xi1>
    %58 = vector.broadcast %cst_31 : f32 to vector<8x256xf32>
    %59 = arith.select %57, %55, %58 : vector<8x256xi1>, vector<8x256xf32>
    %c40 = arith.constant 40 : index
    %c0_32 = arith.constant 0 : index
    %60 = vector.load %arg9[%c40, %c0_32] : memref<72x256xf32, #tpu.memory_space<vmem>>, vector<8x256xf32>
    tpu.vector_store %arg9[%c40, %c0_32], %59 {strides = array<i32>} : memref<72x256xf32, #tpu.memory_space<vmem>>, vector<8x256xf32>,
    %c0_33 = arith.constant 0 : index
    %c143 = arith.constant 143 : index
    %61 = vector.load %arg8[%c0_33, %c143] : memref<8x512xf32, #tpu.memory_space<vmem>>, vector<8x256xf32>
    %cst_34 = arith.constant 0.000000e+00 : f32
    %62 = vector.shape_cast %18 : vector<1x256xi1> to vector<1x256xi1>
    %63 = vector.broadcast %62 : vector<1x256xi1> to vector<8x256xi1>
    %64 = vector.broadcast %cst_34 : f32 to vector<8x256xf32>
    %65 = arith.select %63, %61, %64 : vector<8x256xi1>, vector<8x256xf32>
    %c48 = arith.constant 48 : index
    %c0_35 = arith.constant 0 : index
    %66 = vector.load %arg9[%c48, %c0_35] : memref<72x256xf32, #tpu.memory_space<vmem>>, vector<8x256xf32>
    tpu.vector_store %arg9[%c48, %c0_35], %65 {strides = array<i32>} : memref<72x256xf32, #tpu.memory_space<vmem>>, vector<8x256xf32>,
    %c0_36 = arith.constant 0 : index
    %c144 = arith.constant 144 : index
    %67 = vector.load %arg8[%c0_36, %c144] : memref<8x512xf32, #tpu.memory_space<vmem>>, vector<8x256xf32>
    %c56 = arith.constant 56 : index
    %c0_37 = arith.constant 0 : index
    %68 = vector.load %arg9[%c56, %c0_37] : memref<72x256xf32, #tpu.memory_space<vmem>>, vector<8x256xf32>
    tpu.vector_store %arg9[%c56, %c0_37], %67 {strides = array<i32>} : memref<72x256xf32, #tpu.memory_space<vmem>>, vector<8x256xf32>,
    %c0_38 = arith.constant 0 : index
    %c145 = arith.constant 145 : index
    %69 = vector.load %arg8[%c0_38, %c145] : memref<8x512xf32, #tpu.memory_space<vmem>>, vector<8x256xf32>
    %cst_39 = arith.constant 0.000000e+00 : f32
    %70 = vector.shape_cast %20 : vector<1x256xi1> to vector<1x256xi1>
    %71 = vector.broadcast %70 : vector<1x256xi1> to vector<8x256xi1>
    %72 = vector.broadcast %cst_39 : f32 to vector<8x256xf32>
    %73 = arith.select %71, %69, %72 : vector<8x256xi1>, vector<8x256xf32>
    %c64 = arith.constant 64 : index
    %c0_40 = arith.constant 0 : index
    %74 = vector.load %arg9[%c64, %c0_40] : memref<72x256xf32, #tpu.memory_space<vmem>>, vector<8x256xf32>
    tpu.vector_store %arg9[%c64, %c0_40], %73 {strides = array<i32>} : memref<72x256xf32, #tpu.memory_space<vmem>>, vector<8x256xf32>,
    %c0_41 = arith.constant 0 : index
    %c0_42 = arith.constant 0 : index
    %75 = vector.load %arg3[%c0_41, %c0_42] : memref<4x72xbf16, #tpu.memory_space<vmem>>, vector<4x72xbf16>
    %c0_43 = arith.constant 0 : index
    %c0_44 = arith.constant 0 : index
    %76 = vector.load %arg9[%c0_43, %c0_44] : memref<72x256xf32, #tpu.memory_space<vmem>>, vector<72x256xf32>
    %77 = arith.truncf %76 : vector<72x256xf32> to vector<72x256xbf16>
    %cst_45 = arith.constant dense<0.000000e+00> : vector<4x256xf32>
    %78 = tpu.matmul %75, %77, %cst_45 {dimension_numbers = #tpu.dot_dimension_numbers<[1], [0], [0], [1], [0, 0, 1, 1], [], []>} : vector<4x72xbf16>, vector<72x256xbf16>, vector<4x256xf32> -> vector<4x256xf32>
    %c0_46 = arith.constant 0 : index
    %c0_47 = arith.constant 0 : index
    %79 = vector.load %arg4[%c0_46, %c0_47] : memref<4x1xf32, #tpu.memory_space<vmem>>, vector<4x1xf32>
    %80 = vector.broadcast %79 : vector<4x1xf32> to vector<4x256xf32>
    %81 = arith.addf %78, %80 : vector<4x256xf32>
    %cst_48 = arith.constant 0.000000e+00 : f32
    %82 = vector.broadcast %cst_48 : f32 to vector<4x256xf32>
    %83 = arith.maximumf %81, %82 : vector<4x256xf32>
    %cst_49 = arith.constant 0.000000e+00 : f32
    %84 = vector.broadcast %cst_49 : f32 to vector<4x128xf32>
    %c0_50 = arith.constant 0 : index
    %c0_51 = arith.constant 0 : index
    %85 = vector.load %arg10[%c0_50, %c0_51] : memref<4x512xf32, #tpu.memory_space<vmem>>, vector<4x128xf32>
    tpu.vector_store %arg10[%c0_50, %c0_51], %84 {strides = array<i32>} : memref<4x512xf32, #tpu.memory_space<vmem>>, vector<4x128xf32>,
    %cst_52 = arith.constant 0.000000e+00 : f32
    %86 = vector.broadcast %cst_52 : f32 to vector<4x128xf32>
    %c0_53 = arith.constant 0 : index
    %c384_54 = arith.constant 384 : index
    %87 = vector.load %arg10[%c0_53, %c384_54] : memref<4x512xf32, #tpu.memory_space<vmem>>, vector<4x128xf32>
    tpu.vector_store %arg10[%c0_53, %c384_54], %86 {strides = array<i32>} : memref<4x512xf32, #tpu.memory_space<vmem>>, vector<4x128xf32>,
    %c0_55 = arith.constant 0 : index
    %c128_56 = arith.constant 128 : index
    %88 = vector.load %arg10[%c0_55, %c128_56] : memref<4x512xf32, #tpu.memory_space<vmem>>, vector<4x256xf32>
    tpu.vector_store %arg10[%c0_55, %c128_56], %83 {strides = array<i32>} : memref<4x512xf32, #tpu.memory_space<vmem>>, vector<4x256xf32>,
    %c0_57 = arith.constant 0 : index
    %c111_58 = arith.constant 111 : index
    %89 = vector.load %arg10[%c0_57, %c111_58] : memref<4x512xf32, #tpu.memory_space<vmem>>, vector<4x256xf32>
    %cst_59 = arith.constant 0.000000e+00 : f32
    %90 = vector.shape_cast %18 : vector<1x256xi1> to vector<1x256xi1>
    %91 = vector.broadcast %90 : vector<1x256xi1> to vector<4x256xi1>
    %92 = vector.broadcast %cst_59 : f32 to vector<4x256xf32>
    %93 = arith.select %91, %89, %92 : vector<4x256xi1>, vector<4x256xf32>
    %c0_60 = arith.constant 0 : index
    %c0_61 = arith.constant 0 : index
    %94 = vector.load %arg11[%c0_60, %c0_61] : memref<36x256xf32, #tpu.memory_space<vmem>>, vector<4x256xf32>
    tpu.vector_store %arg11[%c0_60, %c0_61], %93 {strides = array<i32>} : memref<36x256xf32, #tpu.memory_space<vmem>>, vector<4x256xf32>,
    %c0_62 = arith.constant 0 : index
    %c112_63 = arith.constant 112 : index
    %95 = vector.load %arg10[%c0_62, %c112_63] : memref<4x512xf32, #tpu.memory_space<vmem>>, vector<4x256xf32>
    %c4_64 = arith.constant 4 : index
    %c0_65 = arith.constant 0 : index
    %96 = vector.load %arg11[%c4_64, %c0_65] : memref<36x256xf32, #tpu.memory_space<vmem>>, vector<4x256xf32>
    tpu.vector_store %arg11[%c4_64, %c0_65], %95 {strides = array<i32>} : memref<36x256xf32, #tpu.memory_space<vmem>>, vector<4x256xf32>,
    %c0_66 = arith.constant 0 : index
    %c113_67 = arith.constant 113 : index
    %97 = vector.load %arg10[%c0_66, %c113_67] : memref<4x512xf32, #tpu.memory_space<vmem>>, vector<4x256xf32>
    %cst_68 = arith.constant 0.000000e+00 : f32
    %98 = vector.shape_cast %20 : vector<1x256xi1> to vector<1x256xi1>
    %99 = vector.broadcast %98 : vector<1x256xi1> to vector<4x256xi1>
    %100 = vector.broadcast %cst_68 : f32 to vector<4x256xf32>
    %101 = arith.select %99, %97, %100 : vector<4x256xi1>, vector<4x256xf32>
    %c8_69 = arith.constant 8 : index
    %c0_70 = arith.constant 0 : index
    %102 = vector.load %arg11[%c8_69, %c0_70] : memref<36x256xf32, #tpu.memory_space<vmem>>, vector<4x256xf32>
    tpu.vector_store %arg11[%c8_69, %c0_70], %101 {strides = array<i32>} : memref<36x256xf32, #tpu.memory_space<vmem>>, vector<4x256xf32>,
    %c0_71 = arith.constant 0 : index
    %c127_72 = arith.constant 127 : index
    %103 = vector.load %arg10[%c0_71, %c127_72] : memref<4x512xf32, #tpu.memory_space<vmem>>, vector<4x256xf32>
    %cst_73 = arith.constant 0.000000e+00 : f32
    %104 = vector.shape_cast %18 : vector<1x256xi1> to vector<1x256xi1>
    %105 = vector.broadcast %104 : vector<1x256xi1> to vector<4x256xi1>
    %106 = vector.broadcast %cst_73 : f32 to vector<4x256xf32>
    %107 = arith.select %105, %103, %106 : vector<4x256xi1>, vector<4x256xf32>
    %c12 = arith.constant 12 : index
    %c0_74 = arith.constant 0 : index
    %108 = vector.load %arg11[%c12, %c0_74] : memref<36x256xf32, #tpu.memory_space<vmem>>, vector<4x256xf32>
    tpu.vector_store %arg11[%c12, %c0_74], %107 {strides = array<i32>} : memref<36x256xf32, #tpu.memory_space<vmem>>, vector<4x256xf32>,
    %c0_75 = arith.constant 0 : index
    %c128_76 = arith.constant 128 : index
    %109 = vector.load %arg10[%c0_75, %c128_76] : memref<4x512xf32, #tpu.memory_space<vmem>>, vector<4x256xf32>
    %c16_77 = arith.constant 16 : index
    %c0_78 = arith.constant 0 : index
    %110 = vector.load %arg11[%c16_77, %c0_78] : memref<36x256xf32, #tpu.memory_space<vmem>>, vector<4x256xf32>
    tpu.vector_store %arg11[%c16_77, %c0_78], %109 {strides = array<i32>} : memref<36x256xf32, #tpu.memory_space<vmem>>, vector<4x256xf32>,
    %c0_79 = arith.constant 0 : index
    %c129_80 = arith.constant 129 : index
    %111 = vector.load %arg10[%c0_79, %c129_80] : memref<4x512xf32, #tpu.memory_space<vmem>>, vector<4x256xf32>
    %cst_81 = arith.constant 0.000000e+00 : f32
    %112 = vector.shape_cast %20 : vector<1x256xi1> to vector<1x256xi1>
    %113 = vector.broadcast %112 : vector<1x256xi1> to vector<4x256xi1>
    %114 = vector.broadcast %cst_81 : f32 to vector<4x256xf32>
    %115 = arith.select %113, %111, %114 : vector<4x256xi1>, vector<4x256xf32>
    %c20 = arith.constant 20 : index
    %c0_82 = arith.constant 0 : index
    %116 = vector.load %arg11[%c20, %c0_82] : memref<36x256xf32, #tpu.memory_space<vmem>>, vector<4x256xf32>
    tpu.vector_store %arg11[%c20, %c0_82], %115 {strides = array<i32>} : memref<36x256xf32, #tpu.memory_space<vmem>>, vector<4x256xf32>,
    %c0_83 = arith.constant 0 : index
    %c143_84 = arith.constant 143 : index
    %117 = vector.load %arg10[%c0_83, %c143_84] : memref<4x512xf32, #tpu.memory_space<vmem>>, vector<4x256xf32>
    %cst_85 = arith.constant 0.000000e+00 : f32
    %118 = vector.shape_cast %18 : vector<1x256xi1> to vector<1x256xi1>
    %119 = vector.broadcast %118 : vector<1x256xi1> to vector<4x256xi1>
    %120 = vector.broadcast %cst_85 : f32 to vector<4x256xf32>
    %121 = arith.select %119, %117, %120 : vector<4x256xi1>, vector<4x256xf32>
    %c24_86 = arith.constant 24 : index
    %c0_87 = arith.constant 0 : index
    %122 = vector.load %arg11[%c24_86, %c0_87] : memref<36x256xf32, #tpu.memory_space<vmem>>, vector<4x256xf32>
    tpu.vector_store %arg11[%c24_86, %c0_87], %121 {strides = array<i32>} : memref<36x256xf32, #tpu.memory_space<vmem>>, vector<4x256xf32>,
    %c0_88 = arith.constant 0 : index
    %c144_89 = arith.constant 144 : index
    %123 = vector.load %arg10[%c0_88, %c144_89] : memref<4x512xf32, #tpu.memory_space<vmem>>, vector<4x256xf32>
    %c28 = arith.constant 28 : index
    %c0_90 = arith.constant 0 : index
    %124 = vector.load %arg11[%c28, %c0_90] : memref<36x256xf32, #tpu.memory_space<vmem>>, vector<4x256xf32>
    tpu.vector_store %arg11[%c28, %c0_90], %123 {strides = array<i32>} : memref<36x256xf32, #tpu.memory_space<vmem>>, vector<4x256xf32>,
    %c0_91 = arith.constant 0 : index
    %c145_92 = arith.constant 145 : index
    %125 = vector.load %arg10[%c0_91, %c145_92] : memref<4x512xf32, #tpu.memory_space<vmem>>, vector<4x256xf32>
    %cst_93 = arith.constant 0.000000e+00 : f32
    %126 = vector.shape_cast %20 : vector<1x256xi1> to vector<1x256xi1>
    %127 = vector.broadcast %126 : vector<1x256xi1> to vector<4x256xi1>
    %128 = vector.broadcast %cst_93 : f32 to vector<4x256xf32>
    %129 = arith.select %127, %125, %128 : vector<4x256xi1>, vector<4x256xf32>
    %c32_94 = arith.constant 32 : index
    %c0_95 = arith.constant 0 : index
    %130 = vector.load %arg11[%c32_94, %c0_95] : memref<36x256xf32, #tpu.memory_space<vmem>>, vector<4x256xf32>
    tpu.vector_store %arg11[%c32_94, %c0_95], %129 {strides = array<i32>} : memref<36x256xf32, #tpu.memory_space<vmem>>, vector<4x256xf32>,
    %c0_96 = arith.constant 0 : index
    %c0_97 = arith.constant 0 : index
    %131 = vector.load %arg5[%c0_96, %c0_97] : memref<4x36xbf16, #tpu.memory_space<vmem>>, vector<4x36xbf16>
    %c0_98 = arith.constant 0 : index
    %c0_99 = arith.constant 0 : index
    %132 = vector.load %arg11[%c0_98, %c0_99] : memref<36x256xf32, #tpu.memory_space<vmem>>, vector<36x256xf32>
    %133 = arith.truncf %132 : vector<36x256xf32> to vector<36x256xbf16>
    %cst_100 = arith.constant dense<0.000000e+00> : vector<4x256xf32>
    %134 = tpu.matmul %131, %133, %cst_100 {dimension_numbers = #tpu.dot_dimension_numbers<[1], [0], [0], [1], [0, 0, 1, 1], [], []>} : vector<4x36xbf16>, vector<36x256xbf16>, vector<4x256xf32> -> vector<4x256xf32>
    %c0_101 = arith.constant 0 : index
    %c0_102 = arith.constant 0 : index
    %135 = vector.load %arg6[%c0_101, %c0_102] : memref<4x1xf32, #tpu.memory_space<vmem>>, vector<4x1xf32>
    %136 = vector.broadcast %135 : vector<4x1xf32> to vector<4x256xf32>
    %137 = arith.addf %134, %136 : vector<4x256xf32>
    %cst_103 = arith.constant 0.000000e+00 : f32
    %138 = vector.broadcast %cst_103 : f32 to vector<4x256xf32>
    %139 = arith.maximumf %137, %138 : vector<4x256xf32>
    %c0_104 = arith.constant 0 : index
    %c0_105 = arith.constant 0 : index
    %c0_106 = arith.constant 0 : index
    %140 = vector.load %arg7[%c0_104, %c0_105, %c0_106] : memref<1x4x256xf32, #tpu.memory_space<vmem>>, vector<1x4x256xf32>
    %141 = vector.shape_cast %140 : vector<1x4x256xf32> to vector<4x256xf32>
    %142 = vector.shape_cast %139 : vector<4x256xf32> to vector<1x4x256xf32>
    tpu.vector_store %arg7[%c0_104, %c0_105, %c0_106], %142 {strides = array<i32>} : memref<1x4x256xf32, #tpu.memory_space<vmem>>, vector<1x4x256xf32>,
    return
  }
  func.func @transform_0(%arg0: i32) -> (i32, i32, i32) {
    %c0_i32 = arith.constant 0 : i32
    %c0_i32_0 = arith.constant 0 : i32
    %c0_i32_1 = arith.constant 0 : i32
    return %arg0, %c0_i32, %c0_i32_0 : i32, i32, i32
  }
  func.func @transform_1(%arg0: i32) -> (i32, i32, i32) {
    %c0_i32 = arith.constant 0 : i32
    %c0_i32_0 = arith.constant 0 : i32
    %c0_i32_1 = arith.constant 0 : i32
    return %arg0, %c0_i32, %c0_i32_0 : i32, i32, i32
  }
  func.func @transform_2(%arg0: i32) -> (i32, i32) {
    %c0_i32 = arith.constant 0 : i32
    %c0_i32_0 = arith.constant 0 : i32
    %c0_i32_1 = arith.constant 0 : i32
    return %c0_i32, %c0_i32_0 : i32, i32
  }
  func.func @transform_3(%arg0: i32) -> (i32, i32) {
    %c0_i32 = arith.constant 0 : i32
    %c0_i32_0 = arith.constant 0 : i32
    %c0_i32_1 = arith.constant 0 : i32
    return %c0_i32, %c0_i32_0 : i32, i32
  }
  func.func @transform_4(%arg0: i32) -> (i32, i32) {
    %c0_i32 = arith.constant 0 : i32
    %c0_i32_0 = arith.constant 0 : i32
    %c0_i32_1 = arith.constant 0 : i32
    return %c0_i32, %c0_i32_0 : i32, i32
  }
  func.func @transform_5(%arg0: i32) -> (i32, i32) {
    %c0_i32 = arith.constant 0 : i32
    %c0_i32_0 = arith.constant 0 : i32
    %c0_i32_1 = arith.constant 0 : i32
    return %c0_i32, %c0_i32_0 : i32, i32
  }
  func.func @transform_6(%arg0: i32) -> (i32, i32, i32) {
    %c0_i32 = arith.constant 0 : i32
    %c0_i32_0 = arith.constant 0 : i32
    %c0_i32_1 = arith.constant 0 : i32
    return %arg0, %c0_i32, %c0_i32_0 : i32, i32, i32
  }
}

</mosaic_0001>

<llo_original>
// kernel: tpu_custom_call.1
$region0: #{tpu_custom_call.1}
  #allocation0 [shape = 'u32[]', space=smem, size = 0x4, offset = 0x4, fixed_abs, tag = 'smem constant byte address 0x4 - core index']
  #allocation1 [shape = 'u32[144,128]{1,0:T(1,128)}', space=vmem, size = 0x12000, scoped, tag = 'internal scratch']
  #allocation2 [shape = 'f32[8,512]{1,0:T(8,128)}', space=vmem, size = 0x4000, scoped, tag = 'scratch operand']
  #allocation3 [shape = 'f32[72,256]{1,0:T(8,128)}', space=vmem, size = 0x12000, scoped, tag = 'scratch operand']
  #allocation4 [shape = 'f32[4,512]{1,0:T(4,128)}', space=vmem, size = 0x2000, scoped, tag = 'scratch operand']
  #allocation5 [shape = 'f32[36,256]{1,0:T(8,128)}', space=vmem, size = 0xa000, scoped, tag = 'scratch operand']
  %s0 = inlined_call_operand.vmem [shape: bf16[2,4,256], index: 0, kind: input, shape index: {}]
  %s1 = inlined_call_operand.hbm [shape: bf16[2,4,256], index: 1, kind: input, shape index: {}]
  %s2 = inlined_call_operand.vmem [shape: bf16[4,72], index: 2, kind: input, shape index: {}]
  %s3 = inlined_call_operand.vmem [shape: f32[4,1], index: 3, kind: input, shape index: {}]
  %s4 = inlined_call_operand.vmem [shape: bf16[4,36], index: 4, kind: input, shape index: {}]
  %s5 = inlined_call_operand.vmem [shape: f32[4,1], index: 5, kind: input, shape index: {}]
  %s6 = inlined_call_operand.hbm [shape: f32[2,4,256], index: 6, kind: output, shape index: {}]
  %s7 = sld [smem:[#allocation0]]
  $region61: #{tpu_custom_call.1} parent=0
    _
  %s9 = ssub.s32 1, %s7
  %s10 = scalar_select 0, %s9, %s7
  $region1: #{tpu_custom_call.1} parent=0
    #allocation6 [shape = 'u8[4096]{0}', space=vmem, size = 0x1000, scoped, tag = 'input window, operand 1']
    #allocation7 [shape = 's32[2]{0}', space=sflag, size = 0x8, scoped, tag = 'scoped memory for tpu_custom_call.1']
    #allocation8 [shape = 's32[2]{0}', space=sflag, size = 0x8, scoped, tag = 'scoped memory for tpu_custom_call.1']
    #allocation9 [shape = 'u8[8192]{0}', space=vmem, size = 0x2000, scoped, tag = 'output window, operand 0']
    %11 = vsyncpa [#allocation7], 0
    %s12 = scalar_lea.sflag [#allocation7], 1
    %13 = vsyncpa %s12, 0
    %14 = vsyncpa [#allocation8], 0
    %s15 = scalar_lea.sflag [#allocation8], 1
    %16 = vsyncpa %s15, 0
    loop: start=0, step=1, limit=4
    $region2: #{tpu_custom_call.1} parent=1 // loop_pre_header
      _
    $region3: #{tpu_custom_call.1} parent=1 // loop_header
      %s18 = sphi 0, %s22
      %p19 = scmp.ge.s32.totalorder %s18, 4
      %s28 = sphi 0, %s30
      %s31 = sphi 0, %s28
      %s32 = sphi 0, %s31
      %s48 = sphi 0, %s32
      %s54 = sphi 0, %s56
      %s57 = sphi 0, %s54
      %s58 = sphi 0, %s57
      %s74 = sphi 0, %s58
      %s78 = sphi 0, %s78
      %s80 = sphi 0, %s78
      %s81 = sphi 0, %s80
      %s95 = sphi 0, %s81
      %s99 = sphi 0, %s99
      %s101 = sphi 0, %s99
      %s102 = sphi 0, %s101
      %s116 = sphi 0, %s102
      %s120 = sphi 0, %s120
      %s122 = sphi 0, %s120
      %s123 = sphi 0, %s122
      %s137 = sphi 0, %s123
      %s141 = sphi 0, %s141
      %s143 = sphi 0, %s141
      %s144 = sphi 0, %s143
      %s158 = sphi 0, %s144
      %s164 = sphi 0, %s166
      %s167 = sphi 0, %s164
      %s168 = sphi 0, %s167
      %s184 = sphi 0, %s168
    $region4: #{tpu_custom_call.1} parent=1 // loop_header_branch
      %21 = sbr.rel (%p19) target = $region8
    $region5: #{tpu_custom_call.1} parent=1 // loop_body
      %s23 = ssub.s32 %s18, 1
      %s24 = ssub.s32 %s18, 2
      %s25 = sadd.s32 %s18, 1
      %s26 = ssub.s32 %s18, %s25
      %p27 = scmp.eq.s32.totalorder %s26, 0
      %s29 = sadd.s32 %s28, 1
      %s30 = scalar_select %p27, %s28, %s29
      %p33 = pneg %p27
      %p34 = scmp.eq.s32.totalorder %s18, 1
      %p35 = por %p33, %p34
      %p36 = scmp.ne.s32.totalorder %s28, %s31
      %p37 = scmp.eq.s32.totalorder %s18, 0
      %p38 = por %p36, %p37
      %p39 = scmp.ne.s32.totalorder %s28, %s31
      %p40 = scmp.eq.s32.totalorder %s23, 1
      %p41 = por %p39, %p40
      %p42 = scmp.ne.s32.totalorder %s31, %s32
      %p43 = scmp.eq.s32.totalorder %s23, 0
      %p44 = por %p42, %p43
      %p45 = scmp.ne.s32.totalorder %s31, %s32
      %p46 = scmp.eq.s32.totalorder %s24, 1
      %p47 = por %p45, %p46
      %p49 = scmp.ne.s32.totalorder %s32, %s48
      %p50 = scmp.eq.s32.totalorder %s24, 0
      %p51 = por %p49, %p50
      %s52 = ssub.s32 %s18, %s25
      %p53 = scmp.eq.s32.totalorder %s52, 0
      %s55 = sadd.s32 %s54, 1
      %s56 = scalar_select %p53, %s54, %s55
      %p59 = pneg %p53
      %p60 = scmp.eq.s32.totalorder %s18, 1
      %p61 = por %p59, %p60
      %p62 = scmp.ne.s32.totalorder %s54, %s57
      %p63 = scmp.eq.s32.totalorder %s18, 0
      %p64 = por %p62, %p63
      %p65 = scmp.ne.s32.totalorder %s54, %s57
      %p66 = scmp.eq.s32.totalorder %s23, 1
      %p67 = por %p65, %p66
      %p68 = scmp.ne.s32.totalorder %s57, %s58
      %p69 = scmp.eq.s32.totalorder %s23, 0
      %p70 = por %p68, %p69
      %p71 = scmp.ne.s32.totalorder %s57, %s58
      %p72 = scmp.eq.s32.totalorder %s24, 1
      %p73 = por %p71, %p72
      %p75 = scmp.ne.s32.totalorder %s58, %s74
      %p76 = scmp.eq.s32.totalorder %s24, 0
      %p77 = por %p75, %p76
      %s79 = sadd.s32 %s78, 1
      %p82 = scmp.eq.s32.totalorder %s18, 1
      %p83 = scmp.ne.s32.totalorder %s78, %s80
      %p84 = scmp.eq.s32.totalorder %s18, 0
      %p85 = por %p83, %p84
      %p86 = scmp.ne.s32.totalorder %s78, %s80
      %p87 = scmp.eq.s32.totalorder %s23, 1
      %p88 = por %p86, %p87
      %p89 = scmp.ne.s32.totalorder %s80, %s81
      %p90 = scmp.eq.s32.totalorder %s23, 0
      %p91 = por %p89, %p90
      %p92 = scmp.ne.s32.totalorder %s80, %s81
      %p93 = scmp.eq.s32.totalorder %s24, 1
      %p94 = por %p92, %p93
      %p96 = scmp.ne.s32.totalorder %s81, %s95
      %p97 = scmp.eq.s32.totalorder %s24, 0
      %p98 = por %p96, %p97
      %s100 = sadd.s32 %s99, 1
      %p103 = scmp.eq.s32.totalorder %s18, 1
      %p104 = scmp.ne.s32.totalorder %s99, %s101
      %p105 = scmp.eq.s32.totalorder %s18, 0
      %p106 = por %p104, %p105
      %p107 = scmp.ne.s32.totalorder %s99, %s101
      %p108 = scmp.eq.s32.totalorder %s23, 1
      %p109 = por %p107, %p108
      %p110 = scmp.ne.s32.totalorder %s101, %s102
      %p111 = scmp.eq.s32.totalorder %s23, 0
      %p112 = por %p110, %p111
      %p113 = scmp.ne.s32.totalorder %s101, %s102
      %p114 = scmp.eq.s32.totalorder %s24, 1
      %p115 = por %p113, %p114
      %p117 = scmp.ne.s32.totalorder %s102, %s116
      %p118 = scmp.eq.s32.totalorder %s24, 0
      %p119 = por %p117, %p118
      %s121 = sadd.s32 %s120, 1
      %p124 = scmp.eq.s32.totalorder %s18, 1
      %p125 = scmp.ne.s32.totalorder %s120, %s122
      %p126 = scmp.eq.s32.totalorder %s18, 0
      %p127 = por %p125, %p126
      %p128 = scmp.ne.s32.totalorder %s120, %s122
      %p129 = scmp.eq.s32.totalorder %s23, 1
      %p130 = por %p128, %p129
      %p131 = scmp.ne.s32.totalorder %s122, %s123
      %p132 = scmp.eq.s32.totalorder %s23, 0
      %p133 = por %p131, %p132
      %p134 = scmp.ne.s32.totalorder %s122, %s123
      %p135 = scmp.eq.s32.totalorder %s24, 1
      %p136 = por %p134, %p135
      %p138 = scmp.ne.s32.totalorder %s123, %s137
      %p139 = scmp.eq.s32.totalorder %s24, 0
      %p140 = por %p138, %p139
      %s142 = sadd.s32 %s141, 1
      %p145 = scmp.eq.s32.totalorder %s18, 1
      %p146 = scmp.ne.s32.totalorder %s141, %s143
      %p147 = scmp.eq.s32.totalorder %s18, 0
      %p148 = por %p146, %p147
      %p149 = scmp.ne.s32.totalorder %s141, %s143
      %p150 = scmp.eq.s32.totalorder %s23, 1
      %p151 = por %p149, %p150
      %p152 = scmp.ne.s32.totalorder %s143, %s144
      %p153 = scmp.eq.s32.totalorder %s23, 0
      %p154 = por %p152, %p153
      %p155 = scmp.ne.s32.totalorder %s143, %s144
      %p156 = scmp.eq.s32.totalorder %s24, 1
      %p157 = por %p155, %p156
      %p159 = scmp.ne.s32.totalorder %s144, %s158
      %p160 = scmp.eq.s32.totalorder %s24, 0
      %p161 = por %p159, %p160
      %s162 = ssub.s32 %s18, %s25
      %p163 = scmp.eq.s32.totalorder %s162, 0
      %s165 = sadd.s32 %s164, 1
      %s166 = scalar_select %p163, %s164, %s165
      %p169 = pneg %p163
      %p170 = scmp.eq.s32.totalorder %s18, 1
      %p171 = por %p169, %p170
      %p172 = scmp.ne.s32.totalorder %s164, %s167
      %p173 = scmp.eq.s32.totalorder %s18, 0
      %p174 = por %p172, %p173
      %p175 = scmp.ne.s32.totalorder %s164, %s167
      %p176 = scmp.eq.s32.totalorder %s23, 1
      %p177 = por %p175, %p176
      %p178 = scmp.ne.s32.totalorder %s167, %s168
      %p179 = scmp.eq.s32.totalorder %s23, 0
      %p180 = por %p178, %p179
      %p181 = scmp.ne.s32.totalorder %s167, %s168
      %p182 = scmp.eq.s32.totalorder %s24, 1
      %p183 = por %p181, %p182
      %p185 = scmp.ne.s32.totalorder %s168, %s184
      %p186 = scmp.eq.s32.totalorder %s24, 0
      %p187 = por %p185, %p186
      %p188 = scmp.le.s32.totalorder 1, %s18
      %p189 = scmp.lt.s32.totalorder %s18, 3
      %p190 = pnand %p188, %p189
      %p191 = pneg %p190
      // Predicated region
      $region9: #{tpu_custom_call.1} parent=5 // pred_check
        _
      $region10: #{tpu_custom_call.1} parent=5 // pred_check_branch
        %193 = sbr.rel (%p190) target = $region12
      $region11: #{tpu_custom_call.1} parent=5 // pred_region
        %s194 = ssub.s32 %s18, 1
        // Predicated region
        $region13: #{tpu_custom_call.1} parent=11 // pred_check
          %p195 = pneg %p91
        $region14: #{tpu_custom_call.1} parent=11 // pred_check_branch
          %197 = sbr.rel (%p195) target = $region16
        $region15: #{tpu_custom_call.1} parent=11 // pred_region
          _
        $region16: #{tpu_custom_call.1} parent=11 // pred_fallthru
          _
        // Predicated region
        $region17: #{tpu_custom_call.1} parent=11 // pred_check
          %p198 = pneg %p112
        $region18: #{tpu_custom_call.1} parent=11 // pred_check_branch
          %200 = sbr.rel (%p198) target = $region20
        $region19: #{tpu_custom_call.1} parent=11 // pred_region
          _
        $region20: #{tpu_custom_call.1} parent=11 // pred_fallthru
          _
        // Predicated region
        $region21: #{tpu_custom_call.1} parent=11 // pred_check
          %p201 = pneg %p133
        $region22: #{tpu_custom_call.1} parent=11 // pred_check_branch
          %203 = sbr.rel (%p201) target = $region24
        $region23: #{tpu_custom_call.1} parent=11 // pred_region
          _
        $region24: #{tpu_custom_call.1} parent=11 // pred_fallthru
          _
        // Predicated region
        $region25: #{tpu_custom_call.1} parent=11 // pred_check
          %p204 = pneg %p154
        $region26: #{tpu_custom_call.1} parent=11 // pred_check_branch
          %206 = sbr.rel (%p204) target = $region28
        $region27: #{tpu_custom_call.1} parent=11 // pred_region
          _
        $region28: #{tpu_custom_call.1} parent=11 // pred_fallthru
          _
      $region12: #{tpu_custom_call.1} parent=5 // pred_fallthru
        _
      %p207 = scmp.lt.s32.totalorder %s18, 2
      // Predicated region
      $region29: #{tpu_custom_call.1} parent=5 // pred_check
        %p208 = pneg %p207
      $region30: #{tpu_custom_call.1} parent=5 // pred_check_branch
        %210 = sbr.rel (%p208) target = $region32
      $region31: #{tpu_custom_call.1} parent=5 // pred_region
        // Predicated region
        $region33: #{tpu_custom_call.1} parent=31 // pred_check
          %p211 = pneg %p38
        $region34: #{tpu_custom_call.1} parent=31 // pred_check_branch
          %213 = sbr.rel (%p211) target = $region36
        $region35: #{tpu_custom_call.1} parent=31 // pred_region
          %p214 = scmp.lt.s32.totalorder %s18, 1
          %s215 = scalar_select %p214, %s18, 1
          %s216 = smul.addr %s215, 2
          %s217 = smul.addr %s216, 2
          %s218 = scalar_lea.vmem %s0, %s217
        $region36: #{tpu_custom_call.1} parent=31 // pred_fallthru
          _
        // Predicated region
        $region37: #{tpu_custom_call.1} parent=31 // pred_check
          %p219 = pneg %p64
        $region38: #{tpu_custom_call.1} parent=31 // pred_check_branch
          %221 = sbr.rel (%p219) target = $region40
        $region39: #{tpu_custom_call.1} parent=31 // pred_region
          %s222 = sand.u32 %s54, 1
          %s223 = scalar_lea.sflag [#allocation7], %s222
          %s224 = sand.u32 %s54, 1
          %s225 = smul.addr %s224, 4
          %s226 = scalar_lea.vmem [#allocation6], %s225
          %s228 = ssub.s32 64, 64
          %229 = vsyncadd %s223, %s228
          %s230 = smul.addr %s18, 2
          %s231 = smul.addr %s230, 32
          %s232 = scalar_lea.hbm %s1, %s231
          %s234 = sshll.u32 %s226, 4
          %s235 = int_to_ptr.vmem [resolvable:$true] %s234
          %237 = dma.hbm_to_vmem [thread:$0]  %s232, 64, %s235, %s223
        $region40: #{tpu_custom_call.1} parent=31 // pred_fallthru
          _
      $region32: #{tpu_custom_call.1} parent=5 // pred_fallthru
        _
      %p238 = scmp.le.s32.totalorder 1, %s18
      %p239 = scmp.lt.s32.totalorder %s18, 3
      %p240 = pnand %p238, %p239
      %p241 = pneg %p240
      // Predicated region
      $region41: #{tpu_custom_call.1} parent=5 // pred_check
        _
      $region42: #{tpu_custom_call.1} parent=5 // pred_check_branch
        %243 = sbr.rel (%p240) target = $region44
      $region43: #{tpu_custom_call.1} parent=5 // pred_region
        %s244 = ssub.s32 %s18, 1
        %s245 = sand.u32 %s57, 1
        %s246 = scalar_lea.sflag [#allocation7], %s245
        %s247 = sand.u32 %s57, 1
        %s248 = smul.addr %s247, 4
        %s249 = scalar_lea.vmem [#allocation6], %s248
        // Predicated region
        $region45: #{tpu_custom_call.1} parent=43 // pred_check
          %p250 = pneg %p70
        $region46: #{tpu_custom_call.1} parent=43 // pred_check_branch
          %252 = sbr.rel (%p250) target = $region48
        $region47: #{tpu_custom_call.1} parent=43 // pred_region
          %253 = dma.done %s246, 64
        $region48: #{tpu_custom_call.1} parent=43 // pred_fallthru
          _
        %p254 = scmp.lt.s32.totalorder %s23, 1
        %s255 = scalar_select %p254, %s23, 1
        %s256 = smul.addr %s255, 2
        %s257 = smul.addr %s256, 2
        %s258 = scalar_lea.vmem %s0, %s257
        %p259 = pneg %p44
        %p260 = pneg %p41
        %s261 = sand.u32 %s57, 1
        %s262 = scalar_lea.sflag [#allocation7], %s261
        %s263 = sand.u32 %s57, 1
        %s264 = smul.addr %s263, 4
        %s265 = scalar_lea.vmem [#allocation6], %s264
        %p266 = pneg %p70
        %p267 = pneg %p67
        %p268 = pneg %p91
        %p269 = pneg %p88
        %p270 = pneg %p112
        %p271 = pneg %p109
        %p272 = pneg %p133
        %p273 = pneg %p130
        %p274 = pneg %p154
        %p275 = pneg %p151
        %p276 = pneg %p180
        %p277 = pneg %p177
        %s278 = sand.u32 %s167, 1
        %s279 = scalar_lea.sflag [#allocation8], %s278
        %s280 = sand.u32 %s167, 1
        %s281 = smul.addr %s280, 8
        %s282 = scalar_lea.vmem [#allocation9], %s281
        %p283 = scmp.lt.s32.totalorder %s23, 1
        %s284 = scalar_select %p283, %s23, 1
        %s285 = smul.addr %s284, 2
        %s286 = smul.addr %s285, 2
        %s287 = scalar_lea.vmem %s0, %s286
        %v289 = vlaneseq
        %v290 = vand.u32 %v289, 127
        %v291 = vadd.s32 %v290, 128
        %vm292 = vcmp.lt.s32.totalorder %v290, 0
        %v293 = vsub.s32 0, %v290
        %v294 = vsel %vm292, %v293, %v290
        %v295 = vshrl.u32 %v294, 4
        %v296 = vand.u32 %v294, 15
        %v297 = vsub.s32 0, %v296
        %v298 = vsel %vm292, %v297, %v296
        %vm299 = vcmp.lt.s32.totalorder %v291, 0
        %v300 = vsub.s32 0, %v291
        %v301 = vsel %vm299, %v300, %v291
        %v302 = vshrl.u32 %v301, 4
        %v303 = vand.u32 %v301, 15
        %v304 = vsub.s32 0, %v303
        %v305 = vsel %vm299, %v304, %v303
        %vm306 = vcmp.ne.s32.totalorder %v298, 0
        %vm307 = vcmp.ne.s32.totalorder %v305, 0
        %vm308 = vcmp.lt.s32.totalorder %v298, 0
        %vm309 = vcmp.lt.s32.totalorder %v305, 0
        %vm310 = vmand %vm308, %vm306
        %vm311 = vmand %vm309, %vm307
        %v312 = vadd.s32 %v298, 16
        %v313 = vadd.s32 %v305, 16
        %v314 = vsel %vm310, %v312, %v298
        %v315 = vsel %vm311, %v313, %v305
        %vm316 = vcmp.gt.s32.totalorder %v314, 0
        %vm317 = vcmp.gt.s32.totalorder %v315, 0
        %vm318 = vcmp.lt.s32.totalorder %v314, 15
        %vm319 = vcmp.lt.s32.totalorder %v315, 15
        %320 = vst [vmem:[#allocation2] sm:$0xff] 0.0
        %321 = vst [vmem:[#allocation2 + $0x18] sm:$0xff] 0.0
        %v322 = vld [vmem:[%s287] sm:$0xf]
        %v323 = vunpack.c.l.bf16 %v322
        %v325 = vcombine.high %v323, %v323
        %327 = vst [vmem:[#allocation2 + $0x8] sm:$0xf] %v323
        %328 = vst [vmem:[#allocation2 + $0x10] sm:$0xf] %v325
        %v329 = vld [vmem:[%s249] sm:$0xf]
        %v330 = vunpack.c.l.bf16 %v329
        %v332 = vcombine.low %v330, %v330
        %334 = vst [vmem:[#allocation2 + $0x8] sm:$0xf0] %v332
        %335 = vst [vmem:[#allocation2 + $0x10] sm:$0xf0] %v330
        %v336 = vld [vmem:[#allocation2] sm:$0xff]
        %v337 = vld [vmem:[#allocation2 + $0x8] sm:$0xff]
        %v338 = vld [vmem:[#allocation2 + $0x10] sm:$0xff]
        %v339 = vsel %vm316, 1, 0
        %v340 = vsel %vm317, 1, 0
        %vm341 = vcmp.eq.s32.totalorder %v339, 1
        %vm342 = vcmp.eq.s32.totalorder %v340, 1
        %346 = vrot.lane.b32.xlu0 %v336, 17
        %v347 = vpop.permute.xlu0 %346
        %348 = vrot.lane.b32.xlu0 %v337, 17
        %v349 = vpop.permute.xlu0 %348
        %350 = vrot.lane.b32.xlu0 %v338, 17
        %v351 = vpop.permute.xlu0 %350
        %vm352 = vcmask 138240
        %v353 = vsel %vm352, %v347, %v349
        %v354 = vsel %vm352, %v349, %v351
        %v357 = vsel %vm341, %v353, 0.0
        %v358 = vsel %vm342, %v354, 0.0
        %359 = vst [vmem:[#allocation3] sm:$0xff] %v357
        %360 = vst [vmem:[#allocation3 + $0x8] sm:$0xff] %v358
        %v361 = vld [vmem:[#allocation2] sm:$0xff]
        %v362 = vld [vmem:[#allocation2 + $0x8] sm:$0xff]
        %v363 = vld [vmem:[#allocation2 + $0x10] sm:$0xff]
        %367 = vrot.lane.b32.xlu0 %v361, 16
        %v368 = vpop.permute.xlu0 %367
        %369 = vrot.lane.b32.xlu0 %v362, 16
        %v370 = vpop.permute.xlu0 %369
        %371 = vrot.lane.b32.xlu0 %v363, 16
        %v372 = vpop.permute.xlu0 %371
        %vm373 = vcmask 130048
        %v374 = vsel %vm373, %v368, %v370
        %v375 = vsel %vm373, %v370, %v372
        %378 = vst [vmem:[#allocation3 + $0x10] sm:$0xff] %v374
        %379 = vst [vmem:[#allocation3 + $0x18] sm:$0xff] %v375
        %v380 = vld [vmem:[#allocation2] sm:$0xff]
        %v381 = vld [vmem:[#allocation2 + $0x8] sm:$0xff]
        %v382 = vld [vmem:[#allocation2 + $0x10] sm:$0xff]
        %v383 = vsel %vm318, 1, 0
        %v384 = vsel %vm319, 1, 0
        %vm385 = vcmp.eq.s32.totalorder %v383, 1
        %vm386 = vcmp.eq.s32.totalorder %v384, 1
        %390 = vrot.lane.b32.xlu0 %v380, 15
        %v391 = vpop.permute.xlu0 %390
        %392 = vrot.lane.b32.xlu0 %v381, 15
        %v393 = vpop.permute.xlu0 %392
        %394 = vrot.lane.b32.xlu0 %v382, 15
        %v395 = vpop.permute.xlu0 %394
        %vm396 = vcmask 121856
        %v397 = vsel %vm396, %v391, %v393
        %v398 = vsel %vm396, %v393, %v395
        %v401 = vsel %vm385, %v397, 0.0
        %v402 = vsel %vm386, %v398, 0.0
        %403 = vst [vmem:[#allocation3 + $0x20] sm:$0xff] %v401
        %404 = vst [vmem:[#allocation3 + $0x28] sm:$0xff] %v402
        %v405 = vld [vmem:[#allocation2] sm:$0xff]
        %v406 = vld [vmem:[#allocation2 + $0x8] sm:$0xff]
        %v407 = vld [vmem:[#allocation2 + $0x10] sm:$0xff]
        %411 = vrot.lane.b32.xlu0 %v405, 1
        %v412 = vpop.permute.xlu0 %411
        %413 = vrot.lane.b32.xlu0 %v406, 1
        %v414 = vpop.permute.xlu0 %413
        %415 = vrot.lane.b32.xlu0 %v407, 1
        %v416 = vpop.permute.xlu0 %415
        %vm417 = vcmask 7168
        %v418 = vsel %vm417, %v412, %v414
        %v419 = vsel %vm417, %v414, %v416
        %v422 = vsel %vm341, %v418, 0.0
        %v423 = vsel %vm342, %v419, 0.0
        %424 = vst [vmem:[#allocation3 + $0x30] sm:$0xff] %v422
        %425 = vst [vmem:[#allocation3 + $0x38] sm:$0xff] %v423
        %v426 = vld [vmem:[#allocation2 + $0x8] sm:$0xff]
        %v427 = vld [vmem:[#allocation2 + $0x10] sm:$0xff]
        %428 = vst [vmem:[#allocation3 + $0x40] sm:$0xff] %v426
        %429 = vst [vmem:[#allocation3 + $0x48] sm:$0xff] %v427
        %v430 = vld [vmem:[#allocation2 + $0x8] sm:$0xff]
        %v431 = vld [vmem:[#allocation2 + $0x10] sm:$0xff]
        %v432 = vld [vmem:[#allocation2 + $0x18] sm:$0xff]
        %436 = vrot.lane.b32.xlu0 %v430, 127
        %v437 = vpop.permute.xlu0 %436
        %438 = vrot.lane.b32.xlu0 %v431, 127
        %v439 = vpop.permute.xlu0 %438
        %440 = vrot.lane.b32.xlu0 %v432, 127
        %v441 = vpop.permute.xlu0 %440
        %vm442 = vcmask 1039360
        %v443 = vsel %vm442, %v437, %v439
        %v444 = vsel %vm442, %v439, %v441
        %v447 = vsel %vm385, %v443, 0.0
        %v448 = vsel %vm386, %v444, 0.0
        %449 = vst [vmem:[#allocation3 + $0x50] sm:$0xff] %v447
        %450 = vst [vmem:[#allocation3 + $0x58] sm:$0xff] %v448
        %v451 = vld [vmem:[#allocation2 + $0x8] sm:$0xff]
        %v452 = vld [vmem:[#allocation2 + $0x10] sm:$0xff]
        %v453 = vld [vmem:[#allocation2 + $0x18] sm:$0xff]
        %457 = vrot.lane.b32.xlu0 %v451, 113
        %v458 = vpop.permute.xlu0 %457
        %459 = vrot.lane.b32.xlu0 %v452, 113
        %v460 = vpop.permute.xlu0 %459
        %461 = vrot.lane.b32.xlu0 %v453, 113
        %v462 = vpop.permute.xlu0 %461
        %vm463 = vcmask 924672
        %v464 = vsel %vm463, %v458, %v460
        %v465 = vsel %vm463, %v460, %v462
        %v468 = vsel %vm341, %v464, 0.0
        %v469 = vsel %vm342, %v465, 0.0
        %470 = vst [vmem:[#allocation3 + $0x60] sm:$0xff] %v468
        %471 = vst [vmem:[#allocation3 + $0x68] sm:$0xff] %v469
        %v472 = vld [vmem:[#allocation2 + $0x8] sm:$0xff]
        %v473 = vld [vmem:[#allocation2 + $0x10] sm:$0xff]
        %v474 = vld [vmem:[#allocation2 + $0x18] sm:$0xff]
        %478 = vrot.lane.b32.xlu0 %v472, 112
        %v479 = vpop.permute.xlu0 %478
        %480 = vrot.lane.b32.xlu0 %v473, 112
        %v481 = vpop.permute.xlu0 %480
        %482 = vrot.lane.b32.xlu0 %v474, 112
        %v483 = vpop.permute.xlu0 %482
        %vm484 = vcmask 916480
        %v485 = vsel %vm484, %v479, %v481
        %v486 = vsel %vm484, %v481, %v483
        %489 = vst [vmem:[#allocation3 + $0x70] sm:$0xff] %v485
        %490 = vst [vmem:[#allocation3 + $0x78] sm:$0xff] %v486
        %v491 = vld [vmem:[#allocation2 + $0x8] sm:$0xff]
        %v492 = vld [vmem:[#allocation2 + $0x10] sm:$0xff]
        %v493 = vld [vmem:[#allocation2 + $0x18] sm:$0xff]
        %497 = vrot.lane.b32.xlu0 %v491, 111
        %v498 = vpop.permute.xlu0 %497
        %499 = vrot.lane.b32.xlu0 %v492, 111
        %v500 = vpop.permute.xlu0 %499
        %501 = vrot.lane.b32.xlu0 %v493, 111
        %v502 = vpop.permute.xlu0 %501
        %vm503 = vcmask 908288
        %v504 = vsel %vm503, %v498, %v500
        %v505 = vsel %vm503, %v500, %v502
        %v508 = vsel %vm385, %v504, 0.0
        %v509 = vsel %vm386, %v505, 0.0
        %510 = vst [vmem:[#allocation3 + $0x80] sm:$0xff] %v508
        %511 = vst [vmem:[#allocation3 + $0x88] sm:$0xff] %v509
        %v512 = vld [vmem:[%s2] sm:$0x3]
        %v513 = vld [vmem:[#allocation3] sm:$0xff]
        %v514 = vld [vmem:[#allocation3 + $0x8] sm:$0xff]
        %v515 = vld [vmem:[#allocation3 + $0x10] sm:$0xff]
        %v516 = vld [vmem:[#allocation3 + $0x18] sm:$0xff]
        %v517 = vld [vmem:[#allocation3 + $0x20] sm:$0xff]
        %v518 = vld [vmem:[#allocation3 + $0x28] sm:$0xff]
        %v519 = vld [vmem:[#allocation3 + $0x30] sm:$0xff]
        %v520 = vld [vmem:[#allocation3 + $0x38] sm:$0xff]
        %v521 = vld [vmem:[#allocation3 + $0x40] sm:$0xff]
        %v522 = vld [vmem:[#allocation3 + $0x48] sm:$0xff]
        %v523 = vld [vmem:[#allocation3 + $0x50] sm:$0xff]
        %v524 = vld [vmem:[#allocation3 + $0x58] sm:$0xff]
        %v525 = vld [vmem:[#allocation3 + $0x60] sm:$0xff]
        %v526 = vld [vmem:[#allocation3 + $0x68] sm:$0xff]
        %v527 = vld [vmem:[#allocation3 + $0x70] sm:$0xff]
        %v528 = vld [vmem:[#allocation3 + $0x78] sm:$0xff]
        %v529 = vld [vmem:[#allocation3 + $0x80] sm:$0xff]
        %v530 = vld [vmem:[#allocation3 + $0x88] sm:$0xff]
        %v531 = vpack.c.bf16 %v515, %v513
        %v532 = vpack.c.bf16 %v516, %v514
        %v533 = vpack.c.bf16 %v519, %v517
        %v534 = vpack.c.bf16 %v520, %v518
        %v535 = vpack.c.bf16 %v523, %v521
        %v536 = vpack.c.bf16 %v524, %v522
        %v537 = vpack.c.bf16 %v527, %v525
        %v538 = vpack.c.bf16 %v528, %v526
        %v539 = vpack.c.bf16 %v529, %v529
        %v540 = vpack.c.bf16 %v530, %v530
        %v541 = vld [vmem:[%s3] sm:$0xf]
        %543 = vset.pattern.permute.xlu0 0
        %544 = vperm.xlu0 %543, %v541
        %v545 = vpop.permute.xlu0 %544
        %vm547 = vcmask 588800
        %v549 = vsel %vm547, %v512, 0
        %vm551 = vcmask 1043456
        %v553 = vsel %vm551, %v539, 0
        %v556 = vsel %vm551, %v540, 0
        %558 = vmatprep.subr.bf16.mxu0 0
        %559 = vmatpush1.bf16.msra.mxu0 0
        %560 = vmatprep.subr.bf16.mxu0 0
        %561 = vmatpush1.bf16.msra.mxu0 0
        %562 = vmatprep.subr.bf16.mxu0 0
        %563 = vmatpush1.bf16.msra.mxu0 0
        %564 = vmatprep.subr.bf16.mxu0 %v556
        %565 = vmatpush1.bf16.msra.mxu0 %v553
        %566 = vmatprep.subr.bf16.mxu0 %v538
        %567 = vmatpush1.bf16.msra.mxu0 %v537
        %568 = vmatprep.subr.bf16.mxu0 %v536
        %569 = vmatpush1.bf16.msra.mxu0 %v535
        %570 = vmatprep.subr.bf16.mxu0 %v534
        %571 = vmatpush1.bf16.msra.mxu0 %v533
        %572 = vmatprep.subr.bf16.mxu0 %v532
        %573 = vmatpush1.bf16.msra.mxu0 %v531
        %574 = vmatprep.subr.bf16.mxu0 0
        %575 = vmatpush2.bf16.msra.mxu0 0
        %576 = vmatprep.subr.bf16.mxu0 0
        %577 = vmatpush2.bf16.msra.mxu0 0
        %578 = vmatprep.subr.bf16.mxu0 0
        %579 = vmatpush2.bf16.msra.mxu0 0
        %580 = vmatprep.subr.bf16.mxu0 0
        %581 = vmatpush2.bf16.msra.mxu0 0
        %582 = vmatprep.subr.bf16.mxu0 0
        %583 = vmatpush2.bf16.msra.mxu0 0
        %584 = vmatprep.subr.bf16.mxu0 0
        %585 = vmatpush2.bf16.msra.mxu0 0
        %586 = vmatprep.subr.bf16.mxu0 0
        %587 = vmatpush2.bf16.msra.mxu0 0
        %588 = vmatprep.subr.bf16.mxu0 0
        %589 = vmatpush2.bf16.msra.mxu0 0
        %590 = vmatprep.mubr.bf16.mxu0 0
        %591 = vmatmul.mubr.bf16.gmra.mxu0 %v549
        %v592 = vpop.f32.mrf.mxu0
        %v593 = vadd.f32 %v545, %v592
        %v594 = vpop.f32.mrf.mxu0
        %v595 = vadd.f32 %v545, %v594
        %v596 = vpop.f32.mrf.mxu0
        %v597 = vpop.f32.mrf.mxu0
        %598 = vdwg.mxu0
        %v599 = vmax.f32 %v593, 0.0
        %v600 = vmax.f32 %v595, 0.0
        %601 = vst [vmem:[#allocation4] sm:$0xf] 0.0
        %602 = vst [vmem:[#allocation4 + $0xc] sm:$0xf] 0.0
        %v605 = vcombine.low %v599, %v600
        %607 = vst [vmem:[#allocation4 + $0x4] sm:$0xff] %v605
        %v608 = vld [vmem:[#allocation4] sm:$0xff]
        %v609 = vld [vmem:[#allocation4 + $0x8] sm:$0xf]
        %v612 = vcombine.high %v608, %v608
        %613 = vrot.lane.b32.xlu0 %v608, 17
        %v614 = vpop.permute.xlu0 %613
        %615 = vrot.lane.b32.xlu0 %v612, 17
        %v616 = vpop.permute.xlu0 %615
        %617 = vrot.lane.b32.xlu0 %v609, 17
        %v618 = vpop.permute.xlu0 %617
        %v619 = vsel %vm352, %v614, %v616
        %v620 = vsel %vm352, %v616, %v618
        %v623 = vsel %vm341, %v619, 0.0
        %v624 = vsel %vm342, %v620, 0.0
        %625 = vst [vmem:[#allocation5] sm:$0xf] %v623
        %626 = vst [vmem:[#allocation5 + $0x8] sm:$0xf] %v624
        %v627 = vld [vmem:[#allocation4] sm:$0xff]
        %v628 = vld [vmem:[#allocation4 + $0x8] sm:$0xf]
        %v631 = vcombine.low %v627, %v627
        %v632 = vcombine.low %v628, %v628
        %633 = vrot.lane.b32.xlu0 %v631, 16
        %v634 = vpop.permute.xlu0 %633
        %635 = vrot.lane.b32.xlu0 %v627, 16
        %v636 = vpop.permute.xlu0 %635
        %637 = vrot.lane.b32.xlu0 %v632, 16
        %v638 = vpop.permute.xlu0 %637
        %v639 = vsel %vm373, %v634, %v636
        %v640 = vsel %vm373, %v636, %v638
        %643 = vst [vmem:[#allocation5] sm:$0xf0] %v639
        %644 = vst [vmem:[#allocation5 + $0x8] sm:$0xf0] %v640
        %v645 = vld [vmem:[#allocation4] sm:$0xff]
        %v646 = vld [vmem:[#allocation4 + $0x8] sm:$0xf]
        %v649 = vcombine.high %v645, %v645
        %650 = vrot.lane.b32.xlu0 %v645, 15
        %v651 = vpop.permute.xlu0 %650
        %652 = vrot.lane.b32.xlu0 %v649, 15
        %v653 = vpop.permute.xlu0 %652
        %654 = vrot.lane.b32.xlu0 %v646, 15
        %v655 = vpop.permute.xlu0 %654
        %v656 = vsel %vm396, %v651, %v653
        %v657 = vsel %vm396, %v653, %v655
        %v660 = vsel %vm385, %v656, 0.0
        %v661 = vsel %vm386, %v657, 0.0
        %662 = vst [vmem:[#allocation5 + $0x10] sm:$0xf] %v660
        %663 = vst [vmem:[#allocation5 + $0x18] sm:$0xf] %v661
        %v664 = vld [vmem:[#allocation4] sm:$0xff]
        %v665 = vld [vmem:[#allocation4 + $0x8] sm:$0xf]
        %v668 = vcombine.high %v664, %v664
        %669 = vrot.lane.b32.xlu0 %v664, 1
        %v670 = vpop.permute.xlu0 %669
        %671 = vrot.lane.b32.xlu0 %v668, 1
        %v672 = vpop.permute.xlu0 %671
        %673 = vrot.lane.b32.xlu0 %v665, 1
        %v674 = vpop.permute.xlu0 %673
        %v675 = vsel %vm417, %v670, %v672
        %v676 = vsel %vm417, %v672, %v674
        %v679 = vsel %vm341, %v675, 0.0
        %v680 = vsel %vm342, %v676, 0.0
        %v683 = vrot.slane %v679, 4
        %v684 = vrot.slane %v680, 4
        %687 = vst [vmem:[#allocation5 + $0x10] sm:$0xf0] %v683
        %688 = vst [vmem:[#allocation5 + $0x18] sm:$0xf0] %v684
        %v689 = vld [vmem:[#allocation4 + $0x4] sm:$0xff]
        %v691 = vcombine.high %v689, %v689
        %693 = vst [vmem:[#allocation5 + $0x20] sm:$0xf] %v689
        %694 = vst [vmem:[#allocation5 + $0x28] sm:$0xf] %v691
        %v695 = vld [vmem:[#allocation4 + $0x4] sm:$0xff]
        %v696 = vld [vmem:[#allocation4 + $0xc] sm:$0xf]
        %v699 = vcombine.high %v695, %v695
        %700 = vrot.lane.b32.xlu0 %v695, 127
        %v701 = vpop.permute.xlu0 %700
        %702 = vrot.lane.b32.xlu0 %v699, 127
        %v703 = vpop.permute.xlu0 %702
        %704 = vrot.lane.b32.xlu0 %v696, 127
        %v705 = vpop.permute.xlu0 %704
        %v706 = vsel %vm442, %v701, %v703
        %v707 = vsel %vm442, %v703, %v705
        %v710 = vsel %vm385, %v706, 0.0
        %v711 = vsel %vm386, %v707, 0.0
        %v714 = vrot.slane %v710, 4
        %v715 = vrot.slane %v711, 4
        %718 = vst [vmem:[#allocation5 + $0x20] sm:$0xf0] %v714
        %719 = vst [vmem:[#allocation5 + $0x28] sm:$0xf0] %v715
        %v720 = vld [vmem:[#allocation4 + $0x4] sm:$0xff]
        %v721 = vld [vmem:[#allocation4 + $0xc] sm:$0xf]
        %v724 = vcombine.high %v720, %v720
        %725 = vrot.lane.b32.xlu0 %v720, 113
        %v726 = vpop.permute.xlu0 %725
        %727 = vrot.lane.b32.xlu0 %v724, 113
        %v728 = vpop.permute.xlu0 %727
        %729 = vrot.lane.b32.xlu0 %v721, 113
        %v730 = vpop.permute.xlu0 %729
        %v731 = vsel %vm463, %v726, %v728
        %v732 = vsel %vm463, %v728, %v730
        %v735 = vsel %vm341, %v731, 0.0
        %v736 = vsel %vm342, %v732, 0.0
        %737 = vst [vmem:[#allocation5 + $0x30] sm:$0xf] %v735
        %738 = vst [vmem:[#allocation5 + $0x38] sm:$0xf] %v736
        %v739 = vld [vmem:[#allocation4 + $0x4] sm:$0xff]
        %v740 = vld [vmem:[#allocation4 + $0xc] sm:$0xf]
        %v743 = vcombine.low %v739, %v739
        %v744 = vcombine.low %v740, %v740
        %745 = vrot.lane.b32.xlu0 %v743, 112
        %v746 = vpop.permute.xlu0 %745
        %747 = vrot.lane.b32.xlu0 %v739, 112
        %v748 = vpop.permute.xlu0 %747
        %749 = vrot.lane.b32.xlu0 %v744, 112
        %v750 = vpop.permute.xlu0 %749
        %v751 = vsel %vm484, %v746, %v748
        %v752 = vsel %vm484, %v748, %v750
        %755 = vst [vmem:[#allocation5 + $0x30] sm:$0xf0] %v751
        %756 = vst [vmem:[#allocation5 + $0x38] sm:$0xf0] %v752
        %v757 = vld [vmem:[#allocation4 + $0x4] sm:$0xff]
        %v758 = vld [vmem:[#allocation4 + $0xc] sm:$0xf]
        %v761 = vcombine.high %v757, %v757
        %762 = vrot.lane.b32.xlu0 %v757, 111
        %v763 = vpop.permute.xlu0 %762
        %764 = vrot.lane.b32.xlu0 %v761, 111
        %v765 = vpop.permute.xlu0 %764
        %766 = vrot.lane.b32.xlu0 %v758, 111
        %v767 = vpop.permute.xlu0 %766
        %v768 = vsel %vm503, %v763, %v765
        %v769 = vsel %vm503, %v765, %v767
        %v772 = vsel %vm385, %v768, 0.0
        %v773 = vsel %vm386, %v769, 0.0
        %774 = vst [vmem:[#allocation5 + $0x40] sm:$0xf] %v772
        %775 = vst [vmem:[#allocation5 + $0x48] sm:$0xf] %v773
        %v776 = vld [vmem:[%s4] sm:$0x3]
        %v777 = vld [vmem:[#allocation5] sm:$0xff]
        %v778 = vld [vmem:[#allocation5 + $0x8] sm:$0xff]
        %v779 = vld [vmem:[#allocation5 + $0x10] sm:$0xff]
        %v780 = vld [vmem:[#allocation5 + $0x18] sm:$0xff]
        %v781 = vld [vmem:[#allocation5 + $0x20] sm:$0xff]
        %v782 = vld [vmem:[#allocation5 + $0x28] sm:$0xff]
        %v783 = vld [vmem:[#allocation5 + $0x30] sm:$0xff]
        %v784 = vld [vmem:[#allocation5 + $0x38] sm:$0xff]
        %v785 = vld [vmem:[#allocation5 + $0x40] sm:$0xf]
        %v786 = vld [vmem:[#allocation5 + $0x48] sm:$0xf]
        %v787 = vpack.c.bf16 %v779, %v777
        %v788 = vpack.c.bf16 %v780, %v778
        %v789 = vpack.c.bf16 %v783, %v781
        %v790 = vpack.c.bf16 %v784, %v782
        %v791 = vpack.c.bf16 %v785, %v785
        %v792 = vpack.c.bf16 %v786, %v786
        %v793 = vld [vmem:[%s5] sm:$0xf]
        %795 = vset.pattern.permute.xlu0 0
        %796 = vperm.xlu0 %795, %v793
        %v797 = vpop.permute.xlu0 %796
        %vm799 = vcmask 293888
        %v801 = vsel %vm799, %v776, 0
        %vm803 = vcmask 1041408
        %v805 = vsel %vm803, %v791, 0
        %v808 = vsel %vm803, %v792, 0
        %810 = vmatprep.subr.bf16.mxu0 0
        %811 = vmatpush1.bf16.msra.mxu0 0
        %812 = vmatprep.subr.bf16.mxu0 0
        %813 = vmatpush1.bf16.msra.mxu0 0
        %814 = vmatprep.subr.bf16.mxu0 0
        %815 = vmatpush1.bf16.msra.mxu0 0
        %816 = vmatprep.subr.bf16.mxu0 0
        %817 = vmatpush1.bf16.msra.mxu0 0
        %818 = vmatprep.subr.bf16.mxu0 0
        %819 = vmatpush1.bf16.msra.mxu0 0
        %820 = vmatprep.subr.bf16.mxu0 %v808
        %821 = vmatpush1.bf16.msra.mxu0 %v805
        %822 = vmatprep.subr.bf16.mxu0 %v790
        %823 = vmatpush1.bf16.msra.mxu0 %v789
        %824 = vmatprep.subr.bf16.mxu0 %v788
        %825 = vmatpush1.bf16.msra.mxu0 %v787
        %826 = vmatprep.subr.bf16.mxu0 0
        %827 = vmatpush2.bf16.msra.mxu0 0
        %828 = vmatprep.subr.bf16.mxu0 0
        %829 = vmatpush2.bf16.msra.mxu0 0
        %830 = vmatprep.subr.bf16.mxu0 0
        %831 = vmatpush2.bf16.msra.mxu0 0
        %832 = vmatprep.subr.bf16.mxu0 0
        %833 = vmatpush2.bf16.msra.mxu0 0
        %834 = vmatprep.subr.bf16.mxu0 0
        %835 = vmatpush2.bf16.msra.mxu0 0
        %836 = vmatprep.subr.bf16.mxu0 0
        %837 = vmatpush2.bf16.msra.mxu0 0
        %838 = vmatprep.subr.bf16.mxu0 0
        %839 = vmatpush2.bf16.msra.mxu0 0
        %840 = vmatprep.subr.bf16.mxu0 0
        %841 = vmatpush2.bf16.msra.mxu0 0
        %842 = vmatprep.mubr.bf16.mxu0 0
        %843 = vmatmul.mubr.bf16.gmra.mxu0 %v801
        %v844 = vpop.f32.mrf.mxu0
        %v845 = vadd.f32 %v797, %v844
        %v846 = vpop.f32.mrf.mxu0
        %v847 = vadd.f32 %v797, %v846
        %v848 = vpop.f32.mrf.mxu0
        %v849 = vpop.f32.mrf.mxu0
        %850 = vdwg.mxu0
        %v851 = vmax.f32 %v845, 0.0
        %v852 = vmax.f32 %v847, 0.0
        %v855 = vcombine.low %v851, %v852
        %857 = vst [vmem:[%s282] sm:$0xff] %v855
        %s858 = sand.u32 %s167, 1
        %s859 = scalar_lea.sflag [#allocation8], %s858
        %s860 = sand.u32 %s167, 1
        %s861 = smul.addr %s860, 8
        %s862 = scalar_lea.vmem [#allocation9], %s861
        // Predicated region
        $region49: #{tpu_custom_call.1} parent=43 // pred_check
          %p863 = pneg %p177
        $region50: #{tpu_custom_call.1} parent=43 // pred_check_branch
          %865 = sbr.rel (%p863) target = $region52
        $region51: #{tpu_custom_call.1} parent=43 // pred_region
          %s867 = ssub.s32 128, 128
          %868 = vsyncadd %s859, %s867
          %s869 = smul.addr %s23, 2
          %s870 = smul.addr %s869, 64
          %s871 = scalar_lea.hbm %s6, %s870
          %s873 = sshll.u32 %s862, 4
          %s874 = int_to_ptr.vmem [resolvable:$true] %s873
          %876 = dma.vmem_to_hbm [thread:$0]  %s874, 128, %s871, %s859
        $region52: #{tpu_custom_call.1} parent=43 // pred_fallthru
          _
      $region44: #{tpu_custom_call.1} parent=5 // pred_fallthru
        _
      %p877 = scmp.le.s32.totalorder 2, %s18
      // Predicated region
      $region53: #{tpu_custom_call.1} parent=5 // pred_check
        %p878 = pneg %p877
      $region54: #{tpu_custom_call.1} parent=5 // pred_check_branch
        %880 = sbr.rel (%p878) target = $region56
      $region55: #{tpu_custom_call.1} parent=5 // pred_region
        %s881 = ssub.s32 %s18, 2
        // Predicated region
        $region57: #{tpu_custom_call.1} parent=55 // pred_check
          %p882 = pneg %p183
        $region58: #{tpu_custom_call.1} parent=55 // pred_check_branch
          %884 = sbr.rel (%p882) target = $region60
        $region59: #{tpu_custom_call.1} parent=55 // pred_region
          %s885 = sand.u32 %s168, 1
          %s886 = scalar_lea.sflag [#allocation8], %s885
          %s887 = sand.u32 %s168, 1
          %s888 = smul.addr %s887, 8
          %s889 = scalar_lea.vmem [#allocation9], %s888
          %890 = dma.done %s886, 128
        $region60: #{tpu_custom_call.1} parent=55 // pred_fallthru
          _
      $region56: #{tpu_custom_call.1} parent=5 // pred_fallthru
        _
    $region6: #{tpu_custom_call.1} parent=1 // loop_footer
      %s22 = sadd.s32 1, %s18
    $region7: #{tpu_custom_call.1} parent=1 // loop_footer_branch
      %17 = sbr.rel target = $region3
    $region8: #{tpu_custom_call.1} parent=1 // loop_exit
      _
    %891 = vsyncpa [#allocation7], 1
    %s892 = scalar_lea.sflag [#allocation7], 1
    %893 = vsyncpa %s892, 1
    %894 = vsyncpa [#allocation8], 1
    %s895 = scalar_lea.sflag [#allocation8], 1
    %896 = vsyncpa %s895, 1

</llo_original>
